<compile_context>
chip_gen: v5e
topology: v5e:2x2
jax: 0.10.0
libtpu: 0.0.40
codegen_flags: <defaults>
</compile_context>

<pallas_src>
import jax
import jax.numpy as jnp
from jax.experimental import pallas as pl
from jax.experimental.pallas import tpu as pltpu

_NEG = -1e30  # additive mask bias for padded tokens (finite, f32-safe)


# ---------------------------------------------------------------------------
# Sizing helpers
# ---------------------------------------------------------------------------
def _round_up(x, m):
    return ((x + m - 1) // m) * m


def _pad_vocab(v):
    # Keep V as-is when already lane-aligned; otherwise pad to a multiple of 256
    # (MXU-friendly on v6e/v7x).  Padded W/b columns are zero.
    return v if v % 128 == 0 else _round_up(v, 256)


def _pick_tv(vp, max_tv=2048):
    """Largest multiple-of-128 tile <= max_tv that divides vp."""
    t0 = min(max_tv, vp)
    t0 -= t0 % 128
    for t in range(t0, 127, -128):
        if vp % t == 0:
            return t
    return vp  # only for tiny vp < 128 (block == full dim is still legal)


def _pick_sc(s, max_sc=256):
    """Sequence chunk: multiple of 16 (free bf16 sublane-merge reshape), divides s."""
    if s <= max_sc:
        return s
    t0 = max_sc - max_sc % 16
    for t in range(t0, 15, -16):
        if s % t == 0:
            return t
    return 16


def _valid_bts(b):
    # Batch tile must divide B and be a multiple of 8 (or B itself) so the
    # (bt, tv) output block satisfies the (8, 128) tiling constraint.
    return [d for d in range(b, 0, -1) if b % d == 0 and (d == b or d % 8 == 0)]


def _pick_bt(b, s, max_lhs_rows=4096):
    cands = _valid_bts(b)
    for d in cands:
        if d * s <= max_lhs_rows:
            return d
    return cands[-1]  # smallest legal tile if nothing fits the row budget


def _vmem_cap_bytes():
    cap = 128 * 1024 * 1024
    try:
        cap = int(pltpu.get_tpu_info().vmem_capacity_bytes)
    except Exception:
        pass
    # Leave headroom: ~51 MiB on v7x (64 MiB/TC), ~100 MiB on v5e/v6e (128 MiB).
    return min(int(cap * 0.8), 100 * 1024 * 1024)


def _encode_vmem_bytes(bt, s, h, tv, sc):
    x_b = 2 * bt * s * h * 2            # bf16 activations, double-buffered
    m_b = 2 * bt * s * 128 * 4          # (bt,S,1) f32 mask bias, lane-padded to 128
    w_b = 2 * h * tv * 2                # bf16 weight tile
    bias_b = 2 * 8 * tv * 4             # (1,tv) f32 bias, sublane-padded to 8
    out_b = 2 * bt * tv * 4             # f32 encoded tile
    rmax_b = bt * tv * 4                # running-max scratch
    tmp_b = 2 * bt * sc * tv * 4        # per-chunk f32 logits temporaries
    return x_b + m_b + w_b + bias_b + out_b + rmax_b + tmp_b


def _fit_encode_tiles(b, s, h, vp, cap):
    bt = _pick_bt(b, s)
    tv = _pick_tv(vp, max_tv=4096)
    sc = _pick_sc(s)
    while _encode_vmem_bytes(bt, s, h, tv, sc) > cap:
        if sc > 16:                      # cheapest lever: shrink the S chunk
            sc = _pick_sc(s, max_sc=max(16, sc // 2))
            continue
        if tv > 128:                     # then narrow the vocab tile
            tv = _pick_tv(vp, max_tv=max(128, tv // 2))
            continue
        smaller = [d for d in _valid_bts(b) if d < bt]
        if smaller:                      # finally shrink the batch tile
            bt = smaller[0]
            continue
        break
    return bt, tv, sc


# ---------------------------------------------------------------------------
# Kernel 1: fused encode (matmul -> mask -> running max -> bias/relu/log1p)
# ---------------------------------------------------------------------------
def _make_encode_kernel(sc):
    def kernel(x_ref, m_ref, w_ref, b_ref, out_ref, rmax_ref):
        bt, s, h = x_ref.shape
        tv = w_ref.shape[1]
        nc = s // sc

        def chunk_max(x, m):
            # (bt*rows, H) @ (H, tv) on the MXU with f32 accumulation, additive
            # mask bias, then max over the chunk's sequence rows.
            r = jnp.dot(x.reshape(-1, h), w_ref[...],
                        preferred_element_type=jnp.float32)
            return jnp.max(r.reshape(bt, -1, tv) + m, axis=1)

        if nc == 1:
            pooled = chunk_max(x_ref[...], m_ref[...])
        else:
            rmax_ref[...] = jnp.full(rmax_ref.shape, _NEG, rmax_ref.dtype)

            @pl.loop(0, nc)
            def _(c):
                s0 = pl.multiple_of(c * sc, sc)
                rmax_ref[...] = jnp.maximum(
                    rmax_ref[...],
                    chunk_max(x_ref[:, pl.ds(s0, sc), :],
                              m_ref[:, pl.ds(s0, sc), :]))

            pooled = rmax_ref[...]

        # Hoisted epilogue on the pooled (bt, tv) tile only: + bias, relu, log1p.
        out_ref[...] = jnp.log1p(jnp.maximum(pooled + b_ref[...], 0.0))

    return kernel


def pallas_encode(emb, mask_bias, w_pad, b_pad, *, sc_override=None):
    """emb [B,S,H] bf16 (S multiple of 16), mask_bias [B,S,1] f32 (0 / -1e30),
    w_pad [H,Vp] bf16, b_pad [1,Vp] f32.  Returns encoded [B,Vp] f32."""
    B, S, H = emb.shape
    Vp = w_pad.shape[1]
    cap = _vmem_cap_bytes()
    bt, tv, sc = _fit_encode_tiles(B, S, H, Vp, cap)
    if sc_override is not None:
        assert S % sc_override == 0 and sc_override % 16 == 0
        sc = sc_override
    est = _encode_vmem_bytes(bt, S, H, tv, sc)
    vmem_limit = int(min(cap, max(32 * 1024 * 1024, 2 * est)))

    # Vocab OUTER / batch INNER: the W (and bias) block index is constant across
    # the inner axis, so their HBM->VMEM DMA is issued once per vocab tile.
    grid = (Vp // tv, B // bt)
    return pl.pallas_call(
        _make_encode_kernel(sc),
        out_shape=jax.ShapeDtypeStruct((B, Vp), jnp.float32),
        grid_spec=pltpu.PrefetchScalarGridSpec(
            num_scalar_prefetch=0,
            grid=grid,
            in_specs=[
                pl.BlockSpec((bt, S, H), lambda v, i: (i, 0, 0)),   # activations
                pl.BlockSpec((bt, S, 1), lambda v, i: (i, 0, 0)),   # mask bias
                pl.BlockSpec((H, tv), lambda v, i: (0, v)),         # W tile
                pl.BlockSpec((1, tv), lambda v, i: (0, v)),         # bias tile
            ],
            out_specs=pl.BlockSpec((bt, tv), lambda v, i: (i, v)),
            scratch_shapes=[pltpu.VMEM((bt, tv), jnp.float32)],     # running max
        ),
        compiler_params=pltpu.CompilerParams(
            dimension_semantics=("parallel", "parallel"),
            vmem_limit_bytes=vmem_limit),
    )(emb, mask_bias, w_pad, b_pad)


# ---------------------------------------------------------------------------
# Kernel 2: row-wise dot-product scores (accumulated over wide vocab tiles)
# ---------------------------------------------------------------------------
def _score_kernel(q_ref, d_ref, s_ref):
    @pl.when(pl.program_id(0) == 0)
    def _():
        s_ref[...] = jnp.zeros_like(s_ref)

    s_ref[...] += jnp.sum(q_ref[...] * d_ref[...], axis=-1, keepdims=True)


def _score2_kernel(q_ref, p_ref, n_ref, ps_ref, ns_ref):
    @pl.when(pl.program_id(0) == 0)
    def _():
        ps_ref[...] = jnp.zeros_like(ps_ref)
        ns_ref[...] = jnp.zeros_like(ns_ref)

    q = q_ref[...]
    ps_ref[...] += jnp.sum(q * p_ref[...], axis=-1, keepdims=True)
    ns_ref[...] += jnp.sum(q * n_ref[...], axis=-1, keepdims=True)


def pallas_row_dot(q_vec, d_vec):
    B, Vp = q_vec.shape
    tvs = _pick_tv(Vp, max_tv=8192)
    scores = pl.pallas_call(
        _score_kernel,
        out_shape=jax.ShapeDtypeStruct((B, 1), jnp.float32),
        grid_spec=pltpu.PrefetchScalarGridSpec(
            num_scalar_prefetch=0,
            grid=(Vp // tvs,),
            in_specs=[pl.BlockSpec((B, tvs), lambda v: (0, v)),
                      pl.BlockSpec((B, tvs), lambda v: (0, v))],
            out_specs=pl.BlockSpec((B, 1), lambda v: (0, 0)),
        ),
        compiler_params=pltpu.CompilerParams(dimension_semantics=("arbitrary",)),
    )(q_vec, d_vec)
    return scores.reshape(-1)


def pallas_row_dot2(q_vec, p_vec, n_vec):
    """Fused pos+neg scoring: q_vec is streamed from HBM only once."""
    B, Vp = q_vec.shape
    tvs = _pick_tv(Vp, max_tv=8192)
    pos, neg = pl.pallas_call(
        _score2_kernel,
        out_shape=(jax.ShapeDtypeStruct((B, 1), jnp.float32),
                   jax.ShapeDtypeStruct((B, 1), jnp.float32)),
        grid_spec=pltpu.PrefetchScalarGridSpec(
            num_scalar_prefetch=0,
            grid=(Vp // tvs,),
            in_specs=[pl.BlockSpec((B, tvs), lambda v: (0, v)),
                      pl.BlockSpec((B, tvs), lambda v: (0, v)),
                      pl.BlockSpec((B, tvs), lambda v: (0, v))],
            out_specs=(pl.BlockSpec((B, 1), lambda v: (0, 0)),
                       pl.BlockSpec((B, 1), lambda v: (0, 0))),
        ),
        compiler_params=pltpu.CompilerParams(dimension_semantics=("arbitrary",)),
    )(q_vec, p_vec, n_vec)
    return pos.reshape(-1), neg.reshape(-1)


# ---------------------------------------------------------------------------
# Host-side glue
# ---------------------------------------------------------------------------
def _prep_inputs(emb, attention_mask):
    """Pad S to a multiple of 16 (free bf16 sublane-merge reshape) and convert
    the attention mask to an additive bias (0 on real tokens, -1e30 on pads)."""
    B, S, H = emb.shape
    s_pad = _round_up(max(S, 16), 16)
    mask_bias = jnp.where(attention_mask[..., None] > 0, 0.0, _NEG
                          ).astype(jnp.float32)
    if s_pad != S:
        emb = jnp.pad(emb, ((0, 0), (0, s_pad - S), (0, 0)))
        mask_bias = jnp.pad(mask_bias, ((0, 0), (0, s_pad - S), (0, 0)),
                            constant_values=_NEG)
    return emb, mask_bias


class L1Regularizer:
    def __init__(self, T=5000, alpha=0.01):
        self.T = T
        self.max_alpha = alpha
        self.current_step = 0
        self.current_alpha = 0.0

    def __call__(self, row_l1_sums, batch_size):
        # current_alpha * sum(|reps|) / batch_size (reps >= 0 so sum == L1)
        l1 = self.current_alpha * jnp.sum(row_l1_sums) / batch_size
        self.step()
        return l1

    def step(self):
        if self.current_step < self.T:
            self.current_step += 1
            self.current_alpha = (self.current_step / self.T) ** 2 * self.max_alpha


class SparseBiEncoder:
    def __init__(self, vocab_size=128, hidden=32,
                 q_alpha=0.01, d_alpha=0.0001, T=5000, key=None):
        key = jax.random.PRNGKey(0) if key is None else key
        k1, k2, k3 = jax.random.split(key, 3)
        self.vocab_size = vocab_size
        self.vocab_pad = _pad_vocab(vocab_size)
        # TODO(synk): HuggingFace AutoModelForMaskedLM backbone is replaced by a
        # deterministic synthetic embedding table + MLM-head linear (bf16 weights,
        # f32 accumulation / post-matmul math).
        self.emb_table = (0.02 * jax.random.normal(
            k1, (vocab_size, hidden), jnp.float32)).astype(jnp.bfloat16)
        w = 0.02 * jax.random.normal(k2, (hidden, vocab_size), jnp.float32)
        b = 0.02 * jax.random.normal(k3, (1, vocab_size), jnp.float32)
        pad = self.vocab_pad - vocab_size
        # Zero-pad the vocab dim: padded columns encode to 0 and are inert in L1
        # and dot scores.
        self.mlm_w = jnp.pad(w, ((0, 0), (0, pad))).astype(jnp.bfloat16)
        self.mlm_b = jnp.pad(b, ((0, 0), (0, pad)))
        self.q_regularizer = L1Regularizer(alpha=q_alpha, T=T)
        self.d_regularizer = L1Regularizer(alpha=d_alpha, T=T)

    # -- encoding ----------------------------------------------------------
    def _encode_padded(self, input_ids, attention_mask):
        emb = jnp.take(self.emb_table, input_ids, axis=0)            # [B,S,H] bf16
        emb, mask_bias = _prep_inputs(emb, attention_mask)
        enc_pad = pallas_encode(emb, mask_bias, self.mlm_w, self.mlm_b)  # [B,Vp]
        # Per-row L1 in XLA (enc >= 0 and padded cols are 0); keeps both grid
        # axes "parallel" for the encode kernel.
        row_l1 = jnp.sum(enc_pad, axis=1)
        return enc_pad, row_l1

    def encode(self, input_ids, attention_mask):
        enc_pad, _ = self._encode_padded(input_ids, attention_mask)
        return enc_pad[:, :self.vocab_size]

    # -- scoring -----------------------------------------------------------
    def score_pairs(self, queries, docs, return_regularizer=False):
        q_vec, q_l1 = self._encode_padded(queries["input_ids"],
                                          queries["attention_mask"])
        d_vec, d_l1 = self._encode_padded(docs["input_ids"],
                                          docs["attention_mask"])
        scores = pallas_row_dot(q_vec, d_vec)
        if return_regularizer:
            q_reg = self.q_regularizer(q_l1, q_vec.shape[0])
            d_reg = self.d_regularizer(d_l1, d_vec.shape[0])
            return scores, q_reg, d_reg
        return scores

    def forward(self, queries, pos_docs, neg_docs):
        # Encode each batch exactly once; keep the reference's regularizer
        # stepping schedule (q stepped twice per forward, second value discarded).
        q_vec, q_l1 = self._encode_padded(queries["input_ids"],
                                          queries["attention_mask"])
        p_vec, p_l1 = self._encode_padded(pos_docs["input_ids"],
                                          pos_docs["attention_mask"])
        n_vec, n_l1 = self._encode_padded(neg_docs["input_ids"],
                                          neg_docs["attention_mask"])
        B = q_vec.shape[0]
        pos_scores, neg_scores = pallas_row_dot2(q_vec, p_vec, n_vec)

        q_reg = self.q_regularizer(q_l1, B)        # 1st score_pairs in reference
        pos_d_reg = self.d_regularizer(p_l1, B)
        _ = self.q_regularizer(q_l1, B)            # 2nd score_pairs (discarded)
        neg_d_reg = self.d_regularizer(n_l1, B)

        # CrossEntropyLoss over [pos, neg] logits with target class 0:
        logits = jnp.stack([pos_scores, neg_scores], axis=1)          # [B, 2]
        ce = jnp.mean(jax.nn.logsumexp(logits, axis=1) - logits[:, 0])
        loss = ce + q_reg + (pos_d_reg + neg_d_reg) / 2.0
        return loss, pos_scores, neg_scores


# ---------------------------------------------------------------------------
if __name__ == "__main__":
    B, S, V, H = 2, 8, 128, 32
    key = jax.random.PRNGKey(0)
    kq, kp, kn = jax.random.split(key, 3)

    def make_batch(k, seq_len=S):
        ids = jax.random.randint(k, (B, seq_len), 0, V, dtype=jnp.int32)
        lens = jnp.array([seq_len, seq_len - 3], dtype=jnp.int32)      # padding
        mask = (jnp.arange(seq_len)[None, :] < lens[:, None]).astype(jnp.int32)
        return {"input_ids": ids, "attention_mask": mask}

    queries = make_batch(kq)
    pos_docs = make_batch(kp)
    neg_docs = make_batch(kn)

    model = SparseBiEncoder(vocab_size=V, hidden=H)

    def ref_encode(ids, mask):
        # Pure-JAX reference with the PyTorch op order: mask->0, relu, log1p, max.
        emb_f32 = jnp.take(model.emb_table, ids, axis=0).astype(jnp.float32)
        w = model.mlm_w[:, :V].astype(jnp.float32)
        b = model.mlm_b[:, :V]
        logits = emb_f32 @ w + b
        logits = jnp.where(mask[..., None] > 0, logits, 0.0)
        return jnp.max(jnp.log1p(jnp.maximum(logits, 0.0)), axis=1)

    # 1) Single-chunk kernel path (S=8 -> padded to 16, one S-chunk).
    enc_got = model.encode(queries["input_ids"], queries["attention_mask"])
    enc_ref = ref_encode(queries["input_ids"], queries["attention_mask"])
    assert enc_got.shape == (B, V)
    assert jnp.allclose(enc_got, enc_ref, atol=1e-4, rtol=1e-4)

    # 2) Multi-chunk (pl.loop) kernel path: longer sequence, forced sc=16.
    long_batch = make_batch(kq, seq_len=48)
    emb_l = jnp.take(model.emb_table, long_batch["input_ids"], axis=0)
    emb_l, bias_l = _prep_inputs(emb_l, long_batch["attention_mask"])
    enc_long = pallas_encode(emb_l, bias_l, model.mlm_w, model.mlm_b,
                             sc_override=16)
    enc_long_ref = ref_encode(long_batch["input_ids"],
                              long_batch["attention_mask"])
    assert jnp.allclose(enc_long[:, :V], enc_long_ref, atol=1e-4, rtol=1e-4)

    # Full forward pass (encode x3, fused pos+neg scoring, CE + L1 regs).
    loss, pos_scores, neg_scores = model.forward(queries, pos_docs, neg_docs)
    jax.block_until_ready((loss, pos_scores, neg_scores))
    assert pos_scores.shape == (B,) and neg_scores.shape == (B,) and loss.shape == ()

    # Scores match an XLA reference dot on the encoded vectors.
    q_enc = model.encode(queries["input_ids"], queries["attention_mask"])
    p_enc = model.encode(pos_docs["input_ids"], pos_docs["attention_mask"])
    assert jnp.allclose(pos_scores, jnp.sum(q_enc * p_enc, axis=-1),
                        atol=1e-3, rtol=1e-3)

    print("KERNEL_OK")
</pallas_src>

<mosaic_0001>
module attributes {stable_mosaic.version = 11 : i64} {
  func.func @kernel(%arg0: i32, %arg1: i32, %arg2: memref<2x16x32xbf16, #tpu.memory_space<vmem>>, %arg3: memref<2x16x1xf32, #tpu.memory_space<vmem>>, %arg4: memref<32x128xbf16, #tpu.memory_space<vmem>>, %arg5: memref<1x128xf32, #tpu.memory_space<vmem>>, %arg6: memref<2x128xf32, #tpu.memory_space<vmem>>, %arg7: memref<2x128xf32, #tpu.memory_space<vmem>>) attributes {dimension_semantics = [#tpu.dimension_semantics<parallel>, #tpu.dimension_semantics<parallel>], iteration_bounds = array<i64: 1, 1>, scalar_prefetch = 0 : i64, scratch_operands = 1 : i64, tpu.core_type = #tpu.core_type<tc>, window_params = [{transform_indices = @transform_0, window_bounds = array<i64: 2, 16, 32>}, {transform_indices = @transform_1, window_bounds = array<i64: 2, 16, 1>}, {transform_indices = @transform_2, window_bounds = array<i64: 32, 128>}, {transform_indices = @transform_3, window_bounds = array<i64: 1, 128>}, {transform_indices = @transform_4, window_bounds = array<i64: 2, 128>}]} {
    %c0 = arith.constant 0 : index
    %c0_0 = arith.constant 0 : index
    %c0_1 = arith.constant 0 : index
    %0 = vector.load %arg2[%c0, %c0_0, %c0_1] : memref<2x16x32xbf16, #tpu.memory_space<vmem>>, vector<2x16x32xbf16>
    %c0_2 = arith.constant 0 : index
    %c0_3 = arith.constant 0 : index
    %c0_4 = arith.constant 0 : index
    %1 = vector.load %arg3[%c0_2, %c0_3, %c0_4] : memref<2x16x1xf32, #tpu.memory_space<vmem>>, vector<2x16x1xf32>
    %2 = vector.shape_cast %0 : vector<2x16x32xbf16> to vector<32x32xbf16>
    %c0_5 = arith.constant 0 : index
    %c0_6 = arith.constant 0 : index
    %3 = vector.load %arg4[%c0_5, %c0_6] : memref<32x128xbf16, #tpu.memory_space<vmem>>, vector<32x128xbf16>
    %cst = arith.constant dense<0.000000e+00> : vector<32x128xf32>
    %4 = tpu.matmul %2, %3, %cst {dimension_numbers = #tpu.dot_dimension_numbers<[1], [0], [0], [1], [0, 0, 1, 1], [], []>} : vector<32x32xbf16>, vector<32x128xbf16>, vector<32x128xf32> -> vector<32x128xf32>
    %5 = vector.shape_cast %4 : vector<32x128xf32> to vector<2x16x128xf32>
    %6 = vector.broadcast %1 : vector<2x16x1xf32> to vector<2x16x128xf32>
    %7 = arith.addf %5, %6 : vector<2x16x128xf32>
    %cst_7 = arith.constant dense<0xFF800000> : vector<2x128xf32>
    %8 = vector.multi_reduction <maximumf>, %7, %cst_7 [1] : vector<2x16x128xf32> to vector<2x128xf32>
    %c0_8 = arith.constant 0 : index
    %c0_9 = arith.constant 0 : index
    %9 = vector.load %arg5[%c0_8, %c0_9] : memref<1x128xf32, #tpu.memory_space<vmem>>, vector<1x128xf32>
    %10 = vector.broadcast %9 : vector<1x128xf32> to vector<2x128xf32>
    %11 = arith.addf %8, %10 : vector<2x128xf32>
    %cst_10 = arith.constant 0.000000e+00 : f32
    %12 = vector.broadcast %cst_10 : f32 to vector<2x128xf32>
    %13 = arith.maximumf %11, %12 : vector<2x128xf32>
    %14 = math.log1p %13 : vector<2x128xf32>
    %c0_11 = arith.constant 0 : index
    %c0_12 = arith.constant 0 : index
    %15 = vector.load %arg6[%c0_11, %c0_12] : memref<2x128xf32, #tpu.memory_space<vmem>>, vector<2x128xf32>
    tpu.vector_store %arg6[%c0_11, %c0_12], %14 {strides = array<i32>} : memref<2x128xf32, #tpu.memory_space<vmem>>, vector<2x128xf32>,
    return
  }
  func.func @transform_0(%arg0: i32, %arg1: i32) -> (i32, i32, i32) {
    %c0_i32 = arith.constant 0 : i32
    %c0_i32_0 = arith.constant 0 : i32
    %c0_i32_1 = arith.constant 0 : i32
    return %arg1, %c0_i32, %c0_i32_0 : i32, i32, i32
  }
  func.func @transform_1(%arg0: i32, %arg1: i32) -> (i32, i32, i32) {
    %c0_i32 = arith.constant 0 : i32
    %c0_i32_0 = arith.constant 0 : i32
    %c0_i32_1 = arith.constant 0 : i32
    return %arg1, %c0_i32, %c0_i32_0 : i32, i32, i32
  }
  func.func @transform_2(%arg0: i32, %arg1: i32) -> (i32, i32) {
    %c0_i32 = arith.constant 0 : i32
    %c0_i32_0 = arith.constant 0 : i32
    return %c0_i32, %arg0 : i32, i32
  }
  func.func @transform_3(%arg0: i32, %arg1: i32) -> (i32, i32) {
    %c0_i32 = arith.constant 0 : i32
    %c0_i32_0 = arith.constant 0 : i32
    return %c0_i32, %arg0 : i32, i32
  }
  func.func @transform_4(%arg0: i32, %arg1: i32) -> (i32, i32) {
    %c0_i32 = arith.constant 0 : i32
    return %arg1, %arg0 : i32, i32
  }
}

</mosaic_0001>

<llo_original>
// kernel: tpu_custom_call.1
$region0: #{tpu_custom_call.1}
  #allocation0 [shape = 'u32[]', space=smem, size = 0x4, offset = 0x4, fixed_abs, tag = 'smem constant byte address 0x4 - core index']
  #allocation1 [shape = 'u32[72,128]{1,0:T(1,128)}', space=vmem, size = 0x9000, scoped, tag = 'internal scratch']
  #allocation2 [shape = 'f32[2,128]{1,0:T(2,128)}', space=vmem, size = 0x400, scoped, tag = 'scratch operand']
  %s0 = inlined_call_operand.vmem [shape: bf16[2,16,32], index: 0, kind: input, shape index: {}]
  %s1 = inlined_call_operand.vmem [shape: f32[2,16,1], index: 1, kind: input, shape index: {}]
  %s2 = inlined_call_operand.vmem [shape: bf16[32,128], index: 2, kind: input, shape index: {}]
  %s3 = inlined_call_operand.vmem [shape: f32[1,128], index: 3, kind: input, shape index: {}]
  %s4 = inlined_call_operand.hbm [shape: f32[2,128], index: 4, kind: output, shape index: {}]
  %s5 = sld [smem:[#allocation0]]
  $region26: #{tpu_custom_call.1} parent=0
    _
  %s7 = ssub.s32 1, %s5
  %s8 = scalar_select 0, %s7, %s5
  $region1: #{tpu_custom_call.1} parent=0
    #allocation3 [shape = 'u8[1024]{0}', space=vmem, size = 0x400, scoped, tag = 'output window, operand 0, single buffered']
    #allocation4 [shape = 's32[1]{0}', space=sflag, size = 0x4, scoped, tag = 'scoped memory for tpu_custom_call.1']
    %9 = vsyncpa [#allocation4], 0
    // Predicated region
    $region2: #{tpu_custom_call.1} parent=1 // pred_check
      _
    $region3: #{tpu_custom_call.1} parent=1 // pred_check_branch
      %11 = sbr.rel (0) target = $region5
    $region4: #{tpu_custom_call.1} parent=1 // pred_region
      _
    $region5: #{tpu_custom_call.1} parent=1 // pred_fallthru
      _
    // Predicated region
    $region6: #{tpu_custom_call.1} parent=1 // pred_check
      _
    $region7: #{tpu_custom_call.1} parent=1 // pred_check_branch
      %13 = sbr.rel (0) target = $region9
    $region8: #{tpu_custom_call.1} parent=1 // pred_region
      _
    $region9: #{tpu_custom_call.1} parent=1 // pred_fallthru
      _
    // Predicated region
    $region10: #{tpu_custom_call.1} parent=1 // pred_check
      _
    $region11: #{tpu_custom_call.1} parent=1 // pred_check_branch
      %15 = sbr.rel (0) target = $region13
    $region12: #{tpu_custom_call.1} parent=1 // pred_region
      _
    $region13: #{tpu_custom_call.1} parent=1 // pred_fallthru
      _
    // Predicated region
    $region14: #{tpu_custom_call.1} parent=1 // pred_check
      _
    $region15: #{tpu_custom_call.1} parent=1 // pred_check_branch
      %17 = sbr.rel (0) target = $region17
    $region16: #{tpu_custom_call.1} parent=1 // pred_region
      _
    $region17: #{tpu_custom_call.1} parent=1 // pred_fallthru
      _
    %v19 = vld [vmem:[%s0] sm:$0xf]
    %v20 = vld [vmem:[%s0 + $0x4] sm:$0xf]
    %v21 = vld [vmem:[%s0 + $0x8] sm:$0xf]
    %v22 = vld [vmem:[%s0 + $0xc] sm:$0xf]
    %v23 = vld [vmem:[%s1] sm:$0xff]
    %v24 = vld [vmem:[%s1 + $0x8] sm:$0xff]
    %v25 = vld [vmem:[%s1 + $0x10] sm:$0xff]
    %v26 = vld [vmem:[%s1 + $0x18] sm:$0xff]
    %v27 = vld [vmem:[%s2] sm:$0xf]
    %v28 = vld [vmem:[%s2 + $0x4] sm:$0xf]
    %v29 = vld [vmem:[%s2 + $0x8] sm:$0xf]
    %v30 = vld [vmem:[%s2 + $0xc] sm:$0xf]
    %v35 = vunpack.c.l.b16 %v19
    %v36 = vunpack.c.l.b16 %v20
    %v37 = vunpack.c.l.b16 %v21
    %v38 = vunpack.c.l.b16 %v22
    %v39 = vpack.c.b16 %v36, %v35
    %v40 = vpack.c.b16 %v38, %v37
    %v45 = vunpack.c.l.b16 %v27
    %v46 = vunpack.c.l.b16 %v28
    %v47 = vunpack.c.l.b16 %v29
    %v48 = vunpack.c.l.b16 %v30
    %v49 = vpack.c.b16 %v46, %v45
    %v50 = vpack.c.b16 %v48, %v47
    %vm53 = vcmask 261120
    %v55 = vsel %vm53, %v39, 0
    %v58 = vsel %vm53, %v40, 0
    %60 = vmatpush.bf16.msra.mxu0 0
    %61 = vmatpush.bf16.msra.mxu0 0
    %62 = vmatpush.bf16.msra.mxu0 0
    %63 = vmatpush.bf16.msra.mxu0 0
    %64 = vmatpush.bf16.msra.mxu0 0
    %65 = vmatpush.bf16.msra.mxu0 0
    %66 = vmatpush.bf16.msra.mxu0 %v50
    %67 = vmatpush.bf16.msra.mxu0 %v49
    %68 = vmatmul.bf16.gmra.mxu0 %v55
    %v69 = vpop.f32.mrf.mxu0
    %v70 = vadd.f32 0.0, %v69
    %v71 = vpop.f32.mrf.mxu0
    %v72 = vadd.f32 0.0, %v71
    %73 = vmatmul.bf16.gmra.mxu0 %v58
    %v74 = vpop.f32.mrf.mxu0
    %v75 = vadd.f32 0.0, %v74
    %v76 = vpop.f32.mrf.mxu0
    %v77 = vadd.f32 0.0, %v76
    %78 = vdwg.mxu0
    %80 = vset.pattern.permute.xlu0 0
    %81 = vperm.xlu0 %80, %v23
    %v82 = vpop.permute.xlu0 %81
    %85 = vset.pattern.permute.xlu0 0
    %86 = vperm.xlu0 %85, %v24
    %v87 = vpop.permute.xlu0 %86
    %90 = vset.pattern.permute.xlu0 0
    %91 = vperm.xlu0 %90, %v25
    %v92 = vpop.permute.xlu0 %91
    %95 = vset.pattern.permute.xlu0 0
    %96 = vperm.xlu0 %95, %v26
    %v97 = vpop.permute.xlu0 %96
    %v99 = vadd.f32 %v70, %v82
    %v100 = vadd.f32 %v72, %v87
    %v101 = vadd.f32 %v75, %v92
    %v102 = vadd.f32 %v77, %v97
    %v103 = vmax.f32 %v99, %v100
    %v104 = vrot.slane %v103, 4
    %v105 = vmax.f32 %v103, %v104
    %v106 = vrot.slane %v105, 2
    %v107 = vmax.f32 %v105, %v106
    %v108 = vrot.slane %v107, 1
    %v109 = vmax.f32 %v107, %v108
    %v110 = vmax.f32 %v101, %v102
    %v111 = vrot.slane %v110, 4
    %v112 = vmax.f32 %v110, %v111
    %v113 = vrot.slane %v112, 2
    %v114 = vmax.f32 %v112, %v113
    %v115 = vrot.slane %v114, 1
    %v116 = vmax.f32 %v114, %v115
    %v117 = vld [vmem:[%s3] sm:$0x1]
    %v119 = vperm.slane %v117, 0
    %v121 = vadd.f32 %v109, %v119
    %v122 = vadd.f32 %v116, %v119
    %v123 = vmax.f32 %v121, 0.0
    %v124 = vmax.f32 %v122, 0.0
    %v125 = vadd.f32 %v123, 1.0
    %v126 = vlog2.pop %v125
    %v127 = vmul.f32 %v126, 0.6931472
    %v128 = vmul.f32 -0.5, %v123
    %v129 = vadd.f32 %v128, 1.0
    %v130 = vmul.f32 %v129, %v123
    %v131 = vand.u32 2147483647, %v123
    %vm132 = vcmp.lt.f32.partialorder %v131, 0.0004427343
    %v133 = vsel %vm132, %v130, %v127
    %v134 = vadd.f32 %v124, 1.0
    %v135 = vlog2.pop %v134
    %v136 = vmul.f32 %v135, 0.6931472
    %v137 = vmul.f32 -0.5, %v124
    %v138 = vadd.f32 %v137, 1.0
    %v139 = vmul.f32 %v138, %v124
    %v140 = vand.u32 2147483647, %v124
    %vm141 = vcmp.lt.f32.partialorder %v140, 0.0004427343
    %v142 = vsel %vm141, %v139, %v136
    %v145 = vrot.slane %v142, 7
    %vm146 = vcmask 1041409
    %v147 = vsel %vm146, %v145, %v133
    %149 = vst [vmem:[#allocation3] sm:$0x3] %v147
    // Predicated region
    $region18: #{tpu_custom_call.1} parent=1 // pred_check
      _
    $region19: #{tpu_custom_call.1} parent=1 // pred_check_branch
      %151 = sbr.rel (0) target = $region21
    $region20: #{tpu_custom_call.1} parent=1 // pred_region
      %153 = vsyncadd [#allocation4], 0
      %s155 = sshll.u32 [#allocation3], 4
      %s156 = int_to_ptr.vmem [resolvable:$true] %s155
      %s157 = sshll.u32 %s4, 4
      %s158 = int_to_ptr.hbm [resolvable:$true] %s157
      %160 = dma.vmem_to_hbm [thread:$0]  %s156, 32, %s158, [#allocation4]
    $region21: #{tpu_custom_call.1} parent=1 // pred_fallthru
      _
    // Predicated region
    $region22: #{tpu_custom_call.1} parent=1 // pred_check
      _
    $region23: #{tpu_custom_call.1} parent=1 // pred_check_branch
      %162 = sbr.rel (0) target = $region25
    $region24: #{tpu_custom_call.1} parent=1 // pred_region
      %164 = dma.done [#allocation4], 32
    $region25: #{tpu_custom_call.1} parent=1 // pred_fallthru
      _
    %165 = vsyncpa [#allocation4], 1

</llo_original>
